<compile_context>
chip_gen: v6e
topology: v6e:2x2x1
jax: 0.10.0
libtpu: 0.0.40
codegen_flags: <defaults>
</compile_context>

<pallas_src>
import jax
import jax.numpy as jnp
from jax.experimental import pallas as pl
from jax.experimental.pallas import tpu as pltpu


def _round_up(a, m):
    return ((a + m - 1) // m) * m


def _discriminator_kernel(xin_ref, w1_ref, whh_ref, w3_ref, bias_ref, out_ref):
    # fc1 on the lane-packed input (G batch rows share the 128-lane dim) with a
    # block-diagonal W1; the input0/input1 columns are already folded into K.
    h = jnp.dot(xin_ref[...], w1_ref[...], preferred_element_type=jnp.float32)
    h = jnp.maximum(h + bias_ref[0:1, :], 0.0)

    # fc2_1, fc2_2, fc2 — statically unrolled; one full-width 128x128 bf16 MXU
    # matmul each, bias/ReLU on the f32 accumulator (VPU stays f32).
    mxu_dtype = whh_ref.dtype
    for layer in range(3):
        h = jnp.dot(h.astype(mxu_dtype), whh_ref[layer],
                    preferred_element_type=jnp.float32)
        h = jnp.maximum(h + bias_ref[layer + 1:layer + 2, :], 0.0)

    # fc3: block-structured (G*H, G) weight -> (TM/G, G) logits (one logit per
    # packed row per lane-group); no M=1 push, no transpose of h.
    g = out_ref.shape[-1]
    logits = jnp.dot(h.astype(w3_ref.dtype), w3_ref[...],
                     preferred_element_type=jnp.float32)
    out_ref[...] = (logits + bias_ref[4:5, 0:g]).astype(out_ref.dtype)


def discriminator_forward(packed, x, t, y, hat_y, *, block_rows=1024):
    """Forward pass. block_rows is the (unpacked) batch tile; sweep 512-2048."""
    g = packed["groups"]
    w1_bd = packed["w1_bd"]
    whh_bd = packed["w_hh_bd"]
    w3_bd = packed["w3_bd"]
    bias = packed["bias"]
    mxu_dtype = w1_bd.dtype

    n, input_dim = x.shape
    assert input_dim == packed["input_dim"], "param / input dim mismatch"
    d_in = input_dim + 2
    gh = whh_bd.shape[-1]  # G * h_dim

    # Treatment / counterfactual mix, folded into the fc1 input columns.
    # (Layout plumbing + 6 flops/row; the 5 linear layers all stay in-kernel.)
    f32 = jnp.float32
    t = t.astype(f32)
    y = y.astype(f32)
    hat_y = hat_y.astype(f32)
    input0 = (1.0 - t) * y + t * hat_y[:, 0:1]
    input1 = t * y + (1.0 - t) * hat_y[:, 1:2]
    inputs = jnp.concatenate([x.astype(f32), input0, input1], axis=1)  # (n, d_in)

    # Adaptive batch tile: multiple of 8*G (sublane alignment of packed rows);
    # aim for ~4 tiles so both v7x TensorCores get work and padded-row waste
    # stays small at moderate n; cap at block_rows for large n.
    row_q = 8 * g
    block_rows = max(_round_up(block_rows, row_q), row_q)
    tm = min(block_rows, max(_round_up(pl.cdiv(n, 4), row_q), row_q))
    num_tiles = pl.cdiv(n, tm)
    n_pad = num_tiles * tm
    if n_pad != n:
        inputs = jnp.pad(inputs, ((0, n_pad - n), (0, 0)))

    # Lane-pack G consecutive rows into the lane dim; bf16 MXU operands.
    inputs_p = inputs.reshape(n_pad // g, g * d_in).astype(mxu_dtype)

    out = pl.pallas_call(
        _discriminator_kernel,
        out_shape=jax.ShapeDtypeStruct((n_pad // g, g), jnp.float32),
        grid=(num_tiles,),
        in_specs=[
            pl.BlockSpec((tm // g, g * d_in), lambda i: (i, 0)),  # packed activations
            pl.BlockSpec((g * d_in, gh), lambda i: (0, 0)),       # fc1 block-diag (resident)
            pl.BlockSpec((3, gh, gh), lambda i: (0, 0, 0)),       # hidden block-diags (resident)
            pl.BlockSpec((gh, g), lambda i: (0, 0)),              # fc3 block weight (resident)
            pl.BlockSpec((5, gh), lambda i: (0, 0)),              # biases, f32 (resident)
        ],
        out_specs=pl.BlockSpec((tm // g, g), lambda i: (i, 0)),
        compiler_params=pltpu.CompilerParams(
            dimension_semantics=("parallel",),
        ),
    )(inputs_p, w1_bd, whh_bd, w3_bd, bias)

    # Packed row r, lane g  <->  original sample r*G + g, so a plain reshape
    # restores batch order.
    return out.reshape(n_pad, 1)[:n]


def xavier_uniform(key, fan_in, fan_out):
    bound = (6.0 / (fan_in + fan_out)) ** 0.5
    # Generated directly as (fan_in, fan_out), i.e. torch's W.T layout.
    return jax.random.uniform(
        key, (fan_in, fan_out), dtype=jnp.float32, minval=-bound, maxval=bound
    )


def init_params(key, input_dim, h_dim):
    """Matches the torch init: xavier_uniform weights, zero biases."""
    k1, k21, k22, k2, k3 = jax.random.split(key, 5)
    return {
        "w1": xavier_uniform(k1, input_dim + 2, h_dim),            # (d_in, H)
        "w_hh": jnp.stack([xavier_uniform(k21, h_dim, h_dim),      # fc2_1
                           xavier_uniform(k22, h_dim, h_dim),      # fc2_2
                           xavier_uniform(k2, h_dim, h_dim)]),     # fc2
        "w3": xavier_uniform(k3, h_dim, 1),                        # (H, 1)
        "b_hidden": jnp.zeros((4, h_dim), jnp.float32),            # b1,b21,b22,b2
        "b3": jnp.zeros((), jnp.float32),                          # fc3 bias (scalar)
    }


def pack_params(params, *, groups=4, mxu_dtype=jnp.bfloat16):
    """Build the lane-packed / block-diagonal bf16 parameter set (done once)."""
    g = groups
    d_in, h = params["w1"].shape
    eye = jnp.eye(g, dtype=jnp.float32)
    w1_bd = jnp.kron(eye, params["w1"]).astype(mxu_dtype)              # (G*d_in, G*H)
    whh_bd = jnp.stack(
        [jnp.kron(eye, params["w_hh"][l]) for l in range(3)]
    ).astype(mxu_dtype)                                                # (3, G*H, G*H)
    w3_bd = jnp.kron(eye, params["w3"]).astype(mxu_dtype)              # (G*H, G)
    bias = jnp.concatenate(
        [jnp.tile(params["b_hidden"].astype(jnp.float32), (1, g)),
         jnp.full((1, g * h), params["b3"], jnp.float32)], axis=0)     # (5, G*H)
    return {
        "groups": g,
        "h_dim": h,
        "input_dim": d_in - 2,
        "w1_bd": w1_bd,
        "w_hh_bd": whh_bd,
        "w3_bd": w3_bd,
        "bias": bias,
    }


def reference_forward(params, x, t, y, hat_y, *, mxu_dtype=jnp.bfloat16):
    """Pure-JAX reference mirroring the PyTorch forward (flag_dropout=False),
    with the same bf16-operand / f32-accumulate casts as the kernel."""
    f32 = jnp.float32
    t = t.astype(f32)
    y = y.astype(f32)
    hat_y = hat_y.astype(f32)
    input0 = (1.0 - t) * y + t * hat_y[:, 0:1]
    input1 = t * y + (1.0 - t) * hat_y[:, 1:2]
    inputs = jnp.concatenate([x.astype(f32), input0, input1], axis=1)
    h = jnp.dot(inputs.astype(mxu_dtype), params["w1"].astype(mxu_dtype),
                preferred_element_type=f32)
    h = jax.nn.relu(h + params["b_hidden"][0:1])
    for layer in range(3):
        h = jnp.dot(h.astype(mxu_dtype), params["w_hh"][layer].astype(mxu_dtype),
                    preferred_element_type=f32)
        h = jax.nn.relu(h + params["b_hidden"][layer + 1:layer + 2])
    out = jnp.dot(h.astype(mxu_dtype), params["w3"].astype(mxu_dtype),
                  preferred_element_type=f32)
    return out + params["b3"]


if __name__ == "__main__":
    input_dim = 30   # so input_dim + 2 = 32 and G*(input_dim+2) = 128
    h_dim = 32

    key = jax.random.PRNGKey(0)
    kp, kb, kx, kt, ky, kh = jax.random.split(key, 6)

    params = init_params(kp, input_dim, h_dim)
    # Use non-zero biases in the test to exercise the bias path (torch init is 0).
    params["b_hidden"] = 0.1 * jax.random.normal(kb, (4, h_dim), dtype=jnp.float32)
    params["b3"] = jnp.float32(0.05)

    packed = pack_params(params, groups=4, mxu_dtype=jnp.bfloat16)

    # --- small single-tile case -------------------------------------------
    batch = 8
    x = jax.random.normal(kx, (batch, input_dim), dtype=jnp.float32)
    t = jax.random.bernoulli(kt, 0.5, (batch, 1)).astype(jnp.float32)
    y = jax.random.normal(ky, (batch, 1), dtype=jnp.float32)
    hat_y = jax.random.normal(kh, (batch, 2), dtype=jnp.float32)

    out = discriminator_forward(packed, x, t, y, hat_y)
    out = jax.block_until_ready(out)
    ref = reference_forward(params, x, t, y, hat_y)
    assert out.shape == (batch, 1)
    assert jnp.allclose(out, ref, atol=1e-3, rtol=1e-3), "mismatch vs JAX reference"

    # --- multi-tile case (exercises the adaptive batch grid + padding) -----
    batch2 = 600
    x2 = jax.random.normal(kx, (batch2, input_dim), dtype=jnp.float32)
    t2 = jax.random.bernoulli(kt, 0.5, (batch2, 1)).astype(jnp.float32)
    y2 = jax.random.normal(ky, (batch2, 1), dtype=jnp.float32)
    h2 = jax.random.normal(kh, (batch2, 2), dtype=jnp.float32)

    out2 = discriminator_forward(packed, x2, t2, y2, h2, block_rows=1024)
    out2 = jax.block_until_ready(out2)
    ref2 = reference_forward(params, x2, t2, y2, h2)
    assert out2.shape == (batch2, 1)
    assert jnp.allclose(out2, ref2, atol=1e-3, rtol=1e-3), \
        "mismatch vs JAX reference (multi-tile)"

    print("KERNEL_OK")
</pallas_src>

<mosaic_0001>
module attributes {stable_mosaic.version = 11 : i64} {
  func.func @_discriminator_kernel(%arg0: i32, %arg1: memref<8x128xbf16, #tpu.memory_space<vmem>>, %arg2: memref<128x128xbf16, #tpu.memory_space<vmem>>, %arg3: memref<3x128x128xbf16, #tpu.memory_space<vmem>>, %arg4: memref<128x4xbf16, #tpu.memory_space<vmem>>, %arg5: memref<5x128xf32, #tpu.memory_space<vmem>>, %arg6: memref<8x4xf32, #tpu.memory_space<vmem>>) attributes {dimension_semantics = [#tpu.dimension_semantics<parallel>], iteration_bounds = array<i64: 1>, scalar_prefetch = 0 : i64, scratch_operands = 0 : i64, tpu.core_type = #tpu.core_type<tc>, window_params = [{transform_indices = @transform_0, window_bounds = array<i64: 8, 128>}, {pipeline_mode = #tpu.pipeline_mode<synchronous>, transform_indices = @transform_1, window_bounds = array<i64: 128, 128>}, {pipeline_mode = #tpu.pipeline_mode<synchronous>, transform_indices = @transform_2, window_bounds = array<i64: 3, 128, 128>}, {pipeline_mode = #tpu.pipeline_mode<synchronous>, transform_indices = @transform_3, window_bounds = array<i64: 128, 4>}, {pipeline_mode = #tpu.pipeline_mode<synchronous>, transform_indices = @transform_4, window_bounds = array<i64: 5, 128>}, {transform_indices = @transform_5, window_bounds = array<i64: 8, 4>}]} {
    %c0 = arith.constant 0 : index
    %c0_0 = arith.constant 0 : index
    %0 = vector.load %arg1[%c0, %c0_0] : memref<8x128xbf16, #tpu.memory_space<vmem>>, vector<8x128xbf16>
    %c0_1 = arith.constant 0 : index
    %c0_2 = arith.constant 0 : index
    %1 = vector.load %arg2[%c0_1, %c0_2] : memref<128x128xbf16, #tpu.memory_space<vmem>>, vector<128x128xbf16>
    %cst = arith.constant dense<0.000000e+00> : vector<8x128xf32>
    %2 = tpu.matmul %0, %1, %cst {dimension_numbers = #tpu.dot_dimension_numbers<[1], [0], [0], [1], [0, 0, 1, 1], [], []>} : vector<8x128xbf16>, vector<128x128xbf16>, vector<8x128xf32> -> vector<8x128xf32>
    %c0_3 = arith.constant 0 : index
    %c0_4 = arith.constant 0 : index
    %3 = vector.load %arg5[%c0_3, %c0_4] : memref<5x128xf32, #tpu.memory_space<vmem>>, vector<1x128xf32>
    %4 = vector.broadcast %3 : vector<1x128xf32> to vector<8x128xf32>
    %5 = arith.addf %2, %4 : vector<8x128xf32>
    %cst_5 = arith.constant 0.000000e+00 : f32
    %6 = vector.broadcast %cst_5 : f32 to vector<8x128xf32>
    %7 = arith.maximumf %5, %6 : vector<8x128xf32>
    %8 = arith.truncf %7 : vector<8x128xf32> to vector<8x128xbf16>
    %c0_6 = arith.constant 0 : index
    %c0_7 = arith.constant 0 : index
    %c0_8 = arith.constant 0 : index
    %9 = vector.load %arg3[%c0_6, %c0_7, %c0_8] : memref<3x128x128xbf16, #tpu.memory_space<vmem>>, vector<1x128x128xbf16>
    %10 = vector.shape_cast %9 : vector<1x128x128xbf16> to vector<128x128xbf16>
    %cst_9 = arith.constant dense<0.000000e+00> : vector<8x128xf32>
    %11 = tpu.matmul %8, %10, %cst_9 {dimension_numbers = #tpu.dot_dimension_numbers<[1], [0], [0], [1], [0, 0, 1, 1], [], []>} : vector<8x128xbf16>, vector<128x128xbf16>, vector<8x128xf32> -> vector<8x128xf32>
    %c1 = arith.constant 1 : index
    %c0_10 = arith.constant 0 : index
    %12 = vector.load %arg5[%c1, %c0_10] : memref<5x128xf32, #tpu.memory_space<vmem>>, vector<1x128xf32>
    %13 = vector.broadcast %12 : vector<1x128xf32> to vector<8x128xf32>
    %14 = arith.addf %11, %13 : vector<8x128xf32>
    %cst_11 = arith.constant 0.000000e+00 : f32
    %15 = vector.broadcast %cst_11 : f32 to vector<8x128xf32>
    %16 = arith.maximumf %14, %15 : vector<8x128xf32>
    %17 = arith.truncf %16 : vector<8x128xf32> to vector<8x128xbf16>
    %c1_12 = arith.constant 1 : index
    %c0_13 = arith.constant 0 : index
    %c0_14 = arith.constant 0 : index
    %18 = vector.load %arg3[%c1_12, %c0_13, %c0_14] : memref<3x128x128xbf16, #tpu.memory_space<vmem>>, vector<1x128x128xbf16>
    %19 = vector.shape_cast %18 : vector<1x128x128xbf16> to vector<128x128xbf16>
    %cst_15 = arith.constant dense<0.000000e+00> : vector<8x128xf32>
    %20 = tpu.matmul %17, %19, %cst_15 {dimension_numbers = #tpu.dot_dimension_numbers<[1], [0], [0], [1], [0, 0, 1, 1], [], []>} : vector<8x128xbf16>, vector<128x128xbf16>, vector<8x128xf32> -> vector<8x128xf32>
    %c2 = arith.constant 2 : index
    %c0_16 = arith.constant 0 : index
    %21 = vector.load %arg5[%c2, %c0_16] : memref<5x128xf32, #tpu.memory_space<vmem>>, vector<1x128xf32>
    %22 = vector.broadcast %21 : vector<1x128xf32> to vector<8x128xf32>
    %23 = arith.addf %20, %22 : vector<8x128xf32>
    %cst_17 = arith.constant 0.000000e+00 : f32
    %24 = vector.broadcast %cst_17 : f32 to vector<8x128xf32>
    %25 = arith.maximumf %23, %24 : vector<8x128xf32>
    %26 = arith.truncf %25 : vector<8x128xf32> to vector<8x128xbf16>
    %c2_18 = arith.constant 2 : index
    %c0_19 = arith.constant 0 : index
    %c0_20 = arith.constant 0 : index
    %27 = vector.load %arg3[%c2_18, %c0_19, %c0_20] : memref<3x128x128xbf16, #tpu.memory_space<vmem>>, vector<1x128x128xbf16>
    %28 = vector.shape_cast %27 : vector<1x128x128xbf16> to vector<128x128xbf16>
    %cst_21 = arith.constant dense<0.000000e+00> : vector<8x128xf32>
    %29 = tpu.matmul %26, %28, %cst_21 {dimension_numbers = #tpu.dot_dimension_numbers<[1], [0], [0], [1], [0, 0, 1, 1], [], []>} : vector<8x128xbf16>, vector<128x128xbf16>, vector<8x128xf32> -> vector<8x128xf32>
    %c3 = arith.constant 3 : index
    %c0_22 = arith.constant 0 : index
    %30 = vector.load %arg5[%c3, %c0_22] : memref<5x128xf32, #tpu.memory_space<vmem>>, vector<1x128xf32>
    %31 = vector.broadcast %30 : vector<1x128xf32> to vector<8x128xf32>
    %32 = arith.addf %29, %31 : vector<8x128xf32>
    %cst_23 = arith.constant 0.000000e+00 : f32
    %33 = vector.broadcast %cst_23 : f32 to vector<8x128xf32>
    %34 = arith.maximumf %32, %33 : vector<8x128xf32>
    %35 = arith.truncf %34 : vector<8x128xf32> to vector<8x128xbf16>
    %c0_24 = arith.constant 0 : index
    %c0_25 = arith.constant 0 : index
    %36 = vector.load %arg4[%c0_24, %c0_25] : memref<128x4xbf16, #tpu.memory_space<vmem>>, vector<128x4xbf16>
    %cst_26 = arith.constant dense<0.000000e+00> : vector<8x4xf32>
    %37 = tpu.matmul %35, %36, %cst_26 {dimension_numbers = #tpu.dot_dimension_numbers<[1], [0], [0], [1], [0, 0, 1, 1], [], []>} : vector<8x128xbf16>, vector<128x4xbf16>, vector<8x4xf32> -> vector<8x4xf32>
    %c4 = arith.constant 4 : index
    %c0_27 = arith.constant 0 : index
    %38 = vector.load %arg5[%c4, %c0_27] : memref<5x128xf32, #tpu.memory_space<vmem>>, vector<1x4xf32>
    %39 = vector.broadcast %38 : vector<1x4xf32> to vector<8x4xf32>
    %40 = arith.addf %37, %39 : vector<8x4xf32>
    %c0_28 = arith.constant 0 : index
    %c0_29 = arith.constant 0 : index
    %41 = vector.load %arg6[%c0_28, %c0_29] : memref<8x4xf32, #tpu.memory_space<vmem>>, vector<8x4xf32>
    tpu.vector_store %arg6[%c0_28, %c0_29], %40 {strides = array<i32>} : memref<8x4xf32, #tpu.memory_space<vmem>>, vector<8x4xf32>,
    return
  }
  func.func @transform_0(%arg0: i32) -> (i32, i32) {
    %c0_i32 = arith.constant 0 : i32
    %c0_i32_0 = arith.constant 0 : i32
    return %arg0, %c0_i32 : i32, i32
  }
  func.func @transform_1(%arg0: i32) -> (i32, i32) {
    %c0_i32 = arith.constant 0 : i32
    %c0_i32_0 = arith.constant 0 : i32
    %c0_i32_1 = arith.constant 0 : i32
    return %c0_i32, %c0_i32_0 : i32, i32
  }
  func.func @transform_2(%arg0: i32) -> (i32, i32, i32) {
    %c0_i32 = arith.constant 0 : i32
    %c0_i32_0 = arith.constant 0 : i32
    %c0_i32_1 = arith.constant 0 : i32
    %c0_i32_2 = arith.constant 0 : i32
    return %c0_i32, %c0_i32_0, %c0_i32_1 : i32, i32, i32
  }
  func.func @transform_3(%arg0: i32) -> (i32, i32) {
    %c0_i32 = arith.constant 0 : i32
    %c0_i32_0 = arith.constant 0 : i32
    %c0_i32_1 = arith.constant 0 : i32
    return %c0_i32, %c0_i32_0 : i32, i32
  }
  func.func @transform_4(%arg0: i32) -> (i32, i32) {
    %c0_i32 = arith.constant 0 : i32
    %c0_i32_0 = arith.constant 0 : i32
    %c0_i32_1 = arith.constant 0 : i32
    return %c0_i32, %c0_i32_0 : i32, i32
  }
  func.func @transform_5(%arg0: i32) -> (i32, i32) {
    %c0_i32 = arith.constant 0 : i32
    %c0_i32_0 = arith.constant 0 : i32
    return %arg0, %c0_i32 : i32, i32
  }
}

</mosaic_0001>

<llo_original>
// kernel: tpu_custom_call.1
$region0: #{tpu_custom_call.1}
  #allocation0 [shape = 'u32[]', space=smem, size = 0x4, offset = 0x4, fixed_abs, tag = 'smem constant byte address 0x4 - core index']
  #allocation1 [shape = 'u32[144,128]{1,0:T(1,128)}', space=vmem, size = 0x12000, scoped, tag = 'internal scratch']
  %s0 = inlined_call_operand.hbm [shape: bf16[8,128], index: 0, kind: input, shape index: {}]
  %s1 = inlined_call_operand.vmem [shape: bf16[128,128], index: 1, kind: input, shape index: {}]
  %s2 = inlined_call_operand.hbm [shape: bf16[3,128,128], index: 2, kind: input, shape index: {}]
  %s3 = inlined_call_operand.vmem [shape: bf16[128,4], index: 3, kind: input, shape index: {}]
  %s4 = inlined_call_operand.vmem [shape: f32[5,128], index: 4, kind: input, shape index: {}]
  %s5 = inlined_call_operand.vmem [shape: f32[8,4], index: 5, kind: output, shape index: {}]
  %s6 = sld [smem:[#allocation0]]
  $region38: #{tpu_custom_call.1} parent=0
    _
  %s8 = ssub.s32 1, %s6
  %s9 = scalar_select 0, %s8, %s6
  $region1: #{tpu_custom_call.1} parent=0
    #allocation2 [shape = 'u8[2048]{0}', space=vmem, size = 0x800, scoped, tag = 'input window, operand 0, single buffered']
    #allocation3 [shape = 's32[1]{0}', space=sflag, size = 0x4, scoped, tag = 'scoped memory for tpu_custom_call.1']
    #allocation4 [shape = 'u8[98304]{0}', space=vmem, size = 0x18000, scoped, tag = 'input window, operand 2, single buffered']
    #allocation5 [shape = 's32[1]{0}', space=sflag, size = 0x4, scoped, tag = 'scoped memory for tpu_custom_call.1']
    %10 = vsyncpa [#allocation3], 0
    %11 = vsyncpa [#allocation5], 0
    // Predicated region
    $region2: #{tpu_custom_call.1} parent=1 // pred_check
      _
    $region3: #{tpu_custom_call.1} parent=1 // pred_check_branch
      %13 = sbr.rel (0) target = $region5
    $region4: #{tpu_custom_call.1} parent=1 // pred_region
      %s15 = ssub.s32 64, 64
      %16 = vsyncadd [#allocation3], %s15
      %s18 = sshll.u32 [#allocation2], 4
      %s19 = int_to_ptr.vmem [resolvable:$true] %s18
      %21 = dma.hbm_to_vmem [thread:$0]  %s0, 64, %s19, [#allocation3]
    $region5: #{tpu_custom_call.1} parent=1 // pred_fallthru
      _
    // Predicated region
    $region6: #{tpu_custom_call.1} parent=1 // pred_check
      _
    $region7: #{tpu_custom_call.1} parent=1 // pred_check_branch
      %23 = sbr.rel (0) target = $region9
    $region8: #{tpu_custom_call.1} parent=1 // pred_region
      _
    $region9: #{tpu_custom_call.1} parent=1 // pred_fallthru
      _
    // Predicated region
    $region10: #{tpu_custom_call.1} parent=1 // pred_check
      _
    $region11: #{tpu_custom_call.1} parent=1 // pred_check_branch
      %25 = sbr.rel (0) target = $region13
    $region12: #{tpu_custom_call.1} parent=1 // pred_region
      %s27 = ssub.s32 3072, 3072
      %28 = vsyncadd [#allocation5], %s27
      %s29 = sshll.u32 [#allocation4], 4
      %s30 = int_to_ptr.vmem [resolvable:$true] %s29
      %35 = dma.hbm_to_vmem [thread:$0]  %s2, 3072, %s30, [#allocation5], 64, 64, 4
    $region13: #{tpu_custom_call.1} parent=1 // pred_fallthru
      _
    // Predicated region
    $region14: #{tpu_custom_call.1} parent=1 // pred_check
      _
    $region15: #{tpu_custom_call.1} parent=1 // pred_check_branch
      %37 = sbr.rel (0) target = $region17
    $region16: #{tpu_custom_call.1} parent=1 // pred_region
      _
    $region17: #{tpu_custom_call.1} parent=1 // pred_fallthru
      _
    // Predicated region
    $region18: #{tpu_custom_call.1} parent=1 // pred_check
      _
    $region19: #{tpu_custom_call.1} parent=1 // pred_check_branch
      %39 = sbr.rel (0) target = $region21
    $region20: #{tpu_custom_call.1} parent=1 // pred_region
      _
    $region21: #{tpu_custom_call.1} parent=1 // pred_fallthru
      _
    // Predicated region
    $region22: #{tpu_custom_call.1} parent=1 // pred_check
      _
    $region23: #{tpu_custom_call.1} parent=1 // pred_check_branch
      %41 = sbr.rel (0) target = $region25
    $region24: #{tpu_custom_call.1} parent=1 // pred_region
      %42 = dma.done [#allocation3], 64
    $region25: #{tpu_custom_call.1} parent=1 // pred_fallthru
      _
    // Predicated region
    $region26: #{tpu_custom_call.1} parent=1 // pred_check
      _
    $region27: #{tpu_custom_call.1} parent=1 // pred_check_branch
      %44 = sbr.rel (0) target = $region29
    $region28: #{tpu_custom_call.1} parent=1 // pred_region
      %45 = dma.done [#allocation5], 3072
    $region29: #{tpu_custom_call.1} parent=1 // pred_fallthru
      _
    %v47 = vld [vmem:[#allocation2] sm:$0xf]
    %v48 = vld [vmem:[%s1] sm:$0xf]
    %v49 = vld [vmem:[%s1 + $0x4] sm:$0xf]
    %v50 = vld [vmem:[%s1 + $0x8] sm:$0xf]
    %v51 = vld [vmem:[%s1 + $0xc] sm:$0xf]
    %v52 = vld [vmem:[%s1 + $0x10] sm:$0xf]
    %v53 = vld [vmem:[%s1 + $0x14] sm:$0xf]
    %v54 = vld [vmem:[%s1 + $0x18] sm:$0xf]
    %v55 = vld [vmem:[%s1 + $0x1c] sm:$0xf]
    %v56 = vld [vmem:[%s1 + $0x20] sm:$0xf]
    %v57 = vld [vmem:[%s1 + $0x24] sm:$0xf]
    %v58 = vld [vmem:[%s1 + $0x28] sm:$0xf]
    %v59 = vld [vmem:[%s1 + $0x2c] sm:$0xf]
    %v60 = vld [vmem:[%s1 + $0x30] sm:$0xf]
    %v61 = vld [vmem:[%s1 + $0x34] sm:$0xf]
    %v62 = vld [vmem:[%s1 + $0x38] sm:$0xf]
    %v63 = vld [vmem:[%s1 + $0x3c] sm:$0xf]
    %v64 = vld [vmem:[%s4] sm:$0x1]
    %v65 = vlaneseq
    %v66 = vshrl.u32 %v65, 7
    %v67 = vsub.s32 0, %v66
    %v68 = vrot.slane %v64, %v67
    %v85 = vunpack.c.l.b16 %v48
    %v86 = vunpack.c.l.b16 %v49
    %v87 = vunpack.c.l.b16 %v50
    %v88 = vunpack.c.l.b16 %v51
    %v89 = vunpack.c.l.b16 %v52
    %v90 = vunpack.c.l.b16 %v53
    %v91 = vunpack.c.l.b16 %v54
    %v92 = vunpack.c.l.b16 %v55
    %v93 = vunpack.c.l.b16 %v56
    %v94 = vunpack.c.l.b16 %v57
    %v95 = vunpack.c.l.b16 %v58
    %v96 = vunpack.c.l.b16 %v59
    %v97 = vunpack.c.l.b16 %v60
    %v98 = vunpack.c.l.b16 %v61
    %v99 = vunpack.c.l.b16 %v62
    %v100 = vunpack.c.l.b16 %v63
    %v101 = vpack.c.b16 %v86, %v85
    %v102 = vpack.c.b16 %v88, %v87
    %v103 = vpack.c.b16 %v90, %v89
    %v104 = vpack.c.b16 %v92, %v91
    %v105 = vpack.c.b16 %v94, %v93
    %v106 = vpack.c.b16 %v96, %v95
    %v107 = vpack.c.b16 %v98, %v97
    %v108 = vpack.c.b16 %v100, %v99
    %117 = vmatprep.subr.bf16.mxu0 0
    %118 = vmatpush1.bf16.msra.mxu0 %v108
    %119 = vmatprep.subr.bf16.mxu0 0
    %120 = vmatpush1.bf16.msra.mxu0 %v107
    %121 = vmatprep.subr.bf16.mxu0 0
    %122 = vmatpush1.bf16.msra.mxu0 %v106
    %123 = vmatprep.subr.bf16.mxu0 0
    %124 = vmatpush1.bf16.msra.mxu0 %v105
    %125 = vmatprep.subr.bf16.mxu0 0
    %126 = vmatpush1.bf16.msra.mxu0 %v104
    %127 = vmatprep.subr.bf16.mxu0 0
    %128 = vmatpush1.bf16.msra.mxu0 %v103
    %129 = vmatprep.subr.bf16.mxu0 0
    %130 = vmatpush1.bf16.msra.mxu0 %v102
    %131 = vmatprep.subr.bf16.mxu0 0
    %132 = vmatpush1.bf16.msra.mxu0 %v101
    %133 = vmatprep.subr.bf16.mxu0 0
    %134 = vmatpush2.bf16.msra.mxu0 0
    %135 = vmatprep.subr.bf16.mxu0 0
    %136 = vmatpush2.bf16.msra.mxu0 0
    %137 = vmatprep.subr.bf16.mxu0 0
    %138 = vmatpush2.bf16.msra.mxu0 0
    %139 = vmatprep.subr.bf16.mxu0 0
    %140 = vmatpush2.bf16.msra.mxu0 0
    %141 = vmatprep.subr.bf16.mxu0 0
    %142 = vmatpush2.bf16.msra.mxu0 0
    %143 = vmatprep.subr.bf16.mxu0 0
    %144 = vmatpush2.bf16.msra.mxu0 0
    %145 = vmatprep.subr.bf16.mxu0 0
    %146 = vmatpush2.bf16.msra.mxu0 0
    %147 = vmatprep.subr.bf16.mxu0 0
    %148 = vmatpush2.bf16.msra.mxu0 0
    %149 = vmatprep.mubr.bf16.mxu0 0
    %150 = vmatmul.mubr.bf16.gmra.mxu0 %v47
    %v151 = vpop.f32.mrf.mxu0
    %v152 = vadd.f32 %v68, %v151
    %v153 = vpop.f32.mrf.mxu0
    %v154 = vpop.f32.mrf.mxu0
    %v155 = vpop.f32.mrf.mxu0
    %156 = vdwg.mxu0
    %v157 = vmax.f32 %v152, 0.0
    %v158 = vpack.c.bf16 %v157, %v157
    %v159 = vld [vmem:[#allocation4] sm:$0xf]
    %v160 = vld [vmem:[#allocation4 + $0x4] sm:$0xf]
    %v161 = vld [vmem:[#allocation4 + $0x8] sm:$0xf]
    %v162 = vld [vmem:[#allocation4 + $0xc] sm:$0xf]
    %v163 = vld [vmem:[#allocation4 + $0x10] sm:$0xf]
    %v164 = vld [vmem:[#allocation4 + $0x14] sm:$0xf]
    %v165 = vld [vmem:[#allocation4 + $0x18] sm:$0xf]
    %v166 = vld [vmem:[#allocation4 + $0x1c] sm:$0xf]
    %v167 = vld [vmem:[#allocation4 + $0x20] sm:$0xf]
    %v168 = vld [vmem:[#allocation4 + $0x24] sm:$0xf]
    %v169 = vld [vmem:[#allocation4 + $0x28] sm:$0xf]
    %v170 = vld [vmem:[#allocation4 + $0x2c] sm:$0xf]
    %v171 = vld [vmem:[#allocation4 + $0x30] sm:$0xf]
    %v172 = vld [vmem:[#allocation4 + $0x34] sm:$0xf]
    %v173 = vld [vmem:[#allocation4 + $0x38] sm:$0xf]
    %v174 = vld [vmem:[#allocation4 + $0x3c] sm:$0xf]
    %v175 = vld [vmem:[%s4 + $0x1] sm:$0x1]
    %v176 = vlaneseq
    %v177 = vshrl.u32 %v176, 7
    %v178 = vsub.s32 0, %v177
    %v179 = vrot.slane %v175, %v178
    %v196 = vunpack.c.l.b16 %v159
    %v197 = vunpack.c.l.b16 %v160
    %v198 = vunpack.c.l.b16 %v161
    %v199 = vunpack.c.l.b16 %v162
    %v200 = vunpack.c.l.b16 %v163
    %v201 = vunpack.c.l.b16 %v164
    %v202 = vunpack.c.l.b16 %v165
    %v203 = vunpack.c.l.b16 %v166
    %v204 = vunpack.c.l.b16 %v167
    %v205 = vunpack.c.l.b16 %v168
    %v206 = vunpack.c.l.b16 %v169
    %v207 = vunpack.c.l.b16 %v170
    %v208 = vunpack.c.l.b16 %v171
    %v209 = vunpack.c.l.b16 %v172
    %v210 = vunpack.c.l.b16 %v173
    %v211 = vunpack.c.l.b16 %v174
    %v212 = vpack.c.b16 %v197, %v196
    %v213 = vpack.c.b16 %v199, %v198
    %v214 = vpack.c.b16 %v201, %v200
    %v215 = vpack.c.b16 %v203, %v202
    %v216 = vpack.c.b16 %v205, %v204
    %v217 = vpack.c.b16 %v207, %v206
    %v218 = vpack.c.b16 %v209, %v208
    %v219 = vpack.c.b16 %v211, %v210
    %228 = vmatprep.subr.bf16.mxu0 0
    %229 = vmatpush1.bf16.msra.mxu0 %v219
    %230 = vmatprep.subr.bf16.mxu0 0
    %231 = vmatpush1.bf16.msra.mxu0 %v218
    %232 = vmatprep.subr.bf16.mxu0 0
    %233 = vmatpush1.bf16.msra.mxu0 %v217
    %234 = vmatprep.subr.bf16.mxu0 0
    %235 = vmatpush1.bf16.msra.mxu0 %v216
    %236 = vmatprep.subr.bf16.mxu0 0
    %237 = vmatpush1.bf16.msra.mxu0 %v215
    %238 = vmatprep.subr.bf16.mxu0 0
    %239 = vmatpush1.bf16.msra.mxu0 %v214
    %240 = vmatprep.subr.bf16.mxu0 0
    %241 = vmatpush1.bf16.msra.mxu0 %v213
    %242 = vmatprep.subr.bf16.mxu0 0
    %243 = vmatpush1.bf16.msra.mxu0 %v212
    %244 = vmatprep.subr.bf16.mxu0 0
    %245 = vmatpush2.bf16.msra.mxu0 0
    %246 = vmatprep.subr.bf16.mxu0 0
    %247 = vmatpush2.bf16.msra.mxu0 0
    %248 = vmatprep.subr.bf16.mxu0 0
    %249 = vmatpush2.bf16.msra.mxu0 0
    %250 = vmatprep.subr.bf16.mxu0 0
    %251 = vmatpush2.bf16.msra.mxu0 0
    %252 = vmatprep.subr.bf16.mxu0 0
    %253 = vmatpush2.bf16.msra.mxu0 0
    %254 = vmatprep.subr.bf16.mxu0 0
    %255 = vmatpush2.bf16.msra.mxu0 0
    %256 = vmatprep.subr.bf16.mxu0 0
    %257 = vmatpush2.bf16.msra.mxu0 0
    %258 = vmatprep.subr.bf16.mxu0 0
    %259 = vmatpush2.bf16.msra.mxu0 0
    %260 = vmatprep.mubr.bf16.mxu0 0
    %261 = vmatmul.mubr.bf16.gmra.mxu0 %v158
    %v262 = vpop.f32.mrf.mxu0
    %v263 = vadd.f32 %v179, %v262
    %v264 = vpop.f32.mrf.mxu0
    %v265 = vpop.f32.mrf.mxu0
    %v266 = vpop.f32.mrf.mxu0
    %267 = vdwg.mxu0
    %v268 = vmax.f32 %v263, 0.0
    %v269 = vpack.c.bf16 %v268, %v268
    %s270 = scalar_lea.vmem [#allocation4], 64
    %v271 = vld [vmem:[%s270] sm:$0xf]
    %v272 = vld [vmem:[%s270 + $0x4] sm:$0xf]
    %v273 = vld [vmem:[%s270 + $0x8] sm:$0xf]
    %v274 = vld [vmem:[%s270 + $0xc] sm:$0xf]
    %v275 = vld [vmem:[%s270 + $0x10] sm:$0xf]
    %v276 = vld [vmem:[%s270 + $0x14] sm:$0xf]
    %v277 = vld [vmem:[%s270 + $0x18] sm:$0xf]
    %v278 = vld [vmem:[%s270 + $0x1c] sm:$0xf]
    %v279 = vld [vmem:[%s270 + $0x20] sm:$0xf]
    %v280 = vld [vmem:[%s270 + $0x24] sm:$0xf]
    %v281 = vld [vmem:[%s270 + $0x28] sm:$0xf]
    %v282 = vld [vmem:[%s270 + $0x2c] sm:$0xf]
    %v283 = vld [vmem:[%s270 + $0x30] sm:$0xf]
    %v284 = vld [vmem:[%s270 + $0x34] sm:$0xf]
    %v285 = vld [vmem:[%s270 + $0x38] sm:$0xf]
    %v286 = vld [vmem:[%s270 + $0x3c] sm:$0xf]
    %v287 = vld [vmem:[%s4 + $0x2] sm:$0x1]
    %v288 = vlaneseq
    %v289 = vshrl.u32 %v288, 7
    %v290 = vsub.s32 0, %v289
    %v291 = vrot.slane %v287, %v290
    %v308 = vunpack.c.l.b16 %v271
    %v309 = vunpack.c.l.b16 %v272
    %v310 = vunpack.c.l.b16 %v273
    %v311 = vunpack.c.l.b16 %v274
    %v312 = vunpack.c.l.b16 %v275
    %v313 = vunpack.c.l.b16 %v276
    %v314 = vunpack.c.l.b16 %v277
    %v315 = vunpack.c.l.b16 %v278
    %v316 = vunpack.c.l.b16 %v279
    %v317 = vunpack.c.l.b16 %v280
    %v318 = vunpack.c.l.b16 %v281
    %v319 = vunpack.c.l.b16 %v282
    %v320 = vunpack.c.l.b16 %v283
    %v321 = vunpack.c.l.b16 %v284
    %v322 = vunpack.c.l.b16 %v285
    %v323 = vunpack.c.l.b16 %v286
    %v324 = vpack.c.b16 %v309, %v308
    %v325 = vpack.c.b16 %v311, %v310
    %v326 = vpack.c.b16 %v313, %v312
    %v327 = vpack.c.b16 %v315, %v314
    %v328 = vpack.c.b16 %v317, %v316
    %v329 = vpack.c.b16 %v319, %v318
    %v330 = vpack.c.b16 %v321, %v320
    %v331 = vpack.c.b16 %v323, %v322
    %340 = vmatprep.subr.bf16.mxu0 0
    %341 = vmatpush1.bf16.msra.mxu0 %v331
    %342 = vmatprep.subr.bf16.mxu0 0
    %343 = vmatpush1.bf16.msra.mxu0 %v330
    %344 = vmatprep.subr.bf16.mxu0 0
    %345 = vmatpush1.bf16.msra.mxu0 %v329
    %346 = vmatprep.subr.bf16.mxu0 0
    %347 = vmatpush1.bf16.msra.mxu0 %v328
    %348 = vmatprep.subr.bf16.mxu0 0
    %349 = vmatpush1.bf16.msra.mxu0 %v327
    %350 = vmatprep.subr.bf16.mxu0 0
    %351 = vmatpush1.bf16.msra.mxu0 %v326
    %352 = vmatprep.subr.bf16.mxu0 0
    %353 = vmatpush1.bf16.msra.mxu0 %v325
    %354 = vmatprep.subr.bf16.mxu0 0
    %355 = vmatpush1.bf16.msra.mxu0 %v324
    %356 = vmatprep.subr.bf16.mxu0 0
    %357 = vmatpush2.bf16.msra.mxu0 0
    %358 = vmatprep.subr.bf16.mxu0 0
    %359 = vmatpush2.bf16.msra.mxu0 0
    %360 = vmatprep.subr.bf16.mxu0 0
    %361 = vmatpush2.bf16.msra.mxu0 0
    %362 = vmatprep.subr.bf16.mxu0 0
    %363 = vmatpush2.bf16.msra.mxu0 0
    %364 = vmatprep.subr.bf16.mxu0 0
    %365 = vmatpush2.bf16.msra.mxu0 0
    %366 = vmatprep.subr.bf16.mxu0 0
    %367 = vmatpush2.bf16.msra.mxu0 0
    %368 = vmatprep.subr.bf16.mxu0 0
    %369 = vmatpush2.bf16.msra.mxu0 0
    %370 = vmatprep.subr.bf16.mxu0 0
    %371 = vmatpush2.bf16.msra.mxu0 0
    %372 = vmatprep.mubr.bf16.mxu0 0
    %373 = vmatmul.mubr.bf16.gmra.mxu0 %v269
    %v374 = vpop.f32.mrf.mxu0
    %v375 = vadd.f32 %v291, %v374
    %v376 = vpop.f32.mrf.mxu0
    %v377 = vpop.f32.mrf.mxu0
    %v378 = vpop.f32.mrf.mxu0
    %379 = vdwg.mxu0
    %v380 = vmax.f32 %v375, 0.0
    %v381 = vpack.c.bf16 %v380, %v380
    %s382 = scalar_lea.vmem [#allocation4], 128
    %v383 = vld [vmem:[%s382] sm:$0xf]
    %v384 = vld [vmem:[%s382 + $0x4] sm:$0xf]
    %v385 = vld [vmem:[%s382 + $0x8] sm:$0xf]
    %v386 = vld [vmem:[%s382 + $0xc] sm:$0xf]
    %v387 = vld [vmem:[%s382 + $0x10] sm:$0xf]
    %v388 = vld [vmem:[%s382 + $0x14] sm:$0xf]
    %v389 = vld [vmem:[%s382 + $0x18] sm:$0xf]
    %v390 = vld [vmem:[%s382 + $0x1c] sm:$0xf]
    %v391 = vld [vmem:[%s382 + $0x20] sm:$0xf]
    %v392 = vld [vmem:[%s382 + $0x24] sm:$0xf]
    %v393 = vld [vmem:[%s382 + $0x28] sm:$0xf]
    %v394 = vld [vmem:[%s382 + $0x2c] sm:$0xf]
    %v395 = vld [vmem:[%s382 + $0x30] sm:$0xf]
    %v396 = vld [vmem:[%s382 + $0x34] sm:$0xf]
    %v397 = vld [vmem:[%s382 + $0x38] sm:$0xf]
    %v398 = vld [vmem:[%s382 + $0x3c] sm:$0xf]
    %v399 = vld [vmem:[%s4 + $0x3] sm:$0x1]
    %v400 = vlaneseq
    %v401 = vshrl.u32 %v400, 7
    %v402 = vsub.s32 0, %v401
    %v403 = vrot.slane %v399, %v402
    %v420 = vunpack.c.l.b16 %v383
    %v421 = vunpack.c.l.b16 %v384
    %v422 = vunpack.c.l.b16 %v385
    %v423 = vunpack.c.l.b16 %v386
    %v424 = vunpack.c.l.b16 %v387
    %v425 = vunpack.c.l.b16 %v388
    %v426 = vunpack.c.l.b16 %v389
    %v427 = vunpack.c.l.b16 %v390
    %v428 = vunpack.c.l.b16 %v391
    %v429 = vunpack.c.l.b16 %v392
    %v430 = vunpack.c.l.b16 %v393
    %v431 = vunpack.c.l.b16 %v394
    %v432 = vunpack.c.l.b16 %v395
    %v433 = vunpack.c.l.b16 %v396
    %v434 = vunpack.c.l.b16 %v397
    %v435 = vunpack.c.l.b16 %v398
    %v436 = vpack.c.b16 %v421, %v420
    %v437 = vpack.c.b16 %v423, %v422
    %v438 = vpack.c.b16 %v425, %v424
    %v439 = vpack.c.b16 %v427, %v426
    %v440 = vpack.c.b16 %v429, %v428
    %v441 = vpack.c.b16 %v431, %v430
    %v442 = vpack.c.b16 %v433, %v432
    %v443 = vpack.c.b16 %v435, %v434
    %452 = vmatprep.subr.bf16.mxu0 0
    %453 = vmatpush1.bf16.msra.mxu0 %v443
    %454 = vmatprep.subr.bf16.mxu0 0
    %455 = vmatpush1.bf16.msra.mxu0 %v442
    %456 = vmatprep.subr.bf16.mxu0 0
    %457 = vmatpush1.bf16.msra.mxu0 %v441
    %458 = vmatprep.subr.bf16.mxu0 0
    %459 = vmatpush1.bf16.msra.mxu0 %v440
    %460 = vmatprep.subr.bf16.mxu0 0
    %461 = vmatpush1.bf16.msra.mxu0 %v439
    %462 = vmatprep.subr.bf16.mxu0 0
    %463 = vmatpush1.bf16.msra.mxu0 %v438
    %464 = vmatprep.subr.bf16.mxu0 0
    %465 = vmatpush1.bf16.msra.mxu0 %v437
    %466 = vmatprep.subr.bf16.mxu0 0
    %467 = vmatpush1.bf16.msra.mxu0 %v436
    %468 = vmatprep.subr.bf16.mxu0 0
    %469 = vmatpush2.bf16.msra.mxu0 0
    %470 = vmatprep.subr.bf16.mxu0 0
    %471 = vmatpush2.bf16.msra.mxu0 0
    %472 = vmatprep.subr.bf16.mxu0 0
    %473 = vmatpush2.bf16.msra.mxu0 0
    %474 = vmatprep.subr.bf16.mxu0 0
    %475 = vmatpush2.bf16.msra.mxu0 0
    %476 = vmatprep.subr.bf16.mxu0 0
    %477 = vmatpush2.bf16.msra.mxu0 0
    %478 = vmatprep.subr.bf16.mxu0 0
    %479 = vmatpush2.bf16.msra.mxu0 0
    %480 = vmatprep.subr.bf16.mxu0 0
    %481 = vmatpush2.bf16.msra.mxu0 0
    %482 = vmatprep.subr.bf16.mxu0 0
    %483 = vmatpush2.bf16.msra.mxu0 0
    %484 = vmatprep.mubr.bf16.mxu0 0
    %485 = vmatmul.mubr.bf16.gmra.mxu0 %v381
    %v486 = vpop.f32.mrf.mxu0
    %v487 = vadd.f32 %v403, %v486
    %v488 = vpop.f32.mrf.mxu0
    %v489 = vpop.f32.mrf.mxu0
    %v490 = vpop.f32.mrf.mxu0
    %491 = vdwg.mxu0
    %v492 = vmax.f32 %v487, 0.0
    %v493 = vpack.c.bf16 %v492, %v492
    %v494 = vld [vmem:[%s3] sm:$0xf]
    %v495 = vld [vmem:[%s3 + $0x4] sm:$0xf]
    %v496 = vld [vmem:[%s3 + $0x8] sm:$0xf]
    %v497 = vld [vmem:[%s3 + $0xc] sm:$0xf]
    %v498 = vld [vmem:[%s3 + $0x10] sm:$0xf]
    %v499 = vld [vmem:[%s3 + $0x14] sm:$0xf]
    %v500 = vld [vmem:[%s3 + $0x18] sm:$0xf]
    %v501 = vld [vmem:[%s3 + $0x1c] sm:$0xf]
    %v502 = vld [vmem:[%s3 + $0x20] sm:$0xf]
    %v503 = vld [vmem:[%s3 + $0x24] sm:$0xf]
    %v504 = vld [vmem:[%s3 + $0x28] sm:$0xf]
    %v505 = vld [vmem:[%s3 + $0x2c] sm:$0xf]
    %v506 = vld [vmem:[%s3 + $0x30] sm:$0xf]
    %v507 = vld [vmem:[%s3 + $0x34] sm:$0xf]
    %v508 = vld [vmem:[%s3 + $0x38] sm:$0xf]
    %v509 = vld [vmem:[%s3 + $0x3c] sm:$0xf]
    %v510 = vld [vmem:[%s4 + $0x4] sm:$0x1]
    %v511 = vlaneseq
    %v512 = vshrl.u32 %v511, 7
    %v513 = vsub.s32 0, %v512
    %v514 = vrot.slane %v510, %v513
    %v531 = vunpack.c.l.b16 %v494
    %v532 = vunpack.c.l.b16 %v495
    %v533 = vunpack.c.l.b16 %v496
    %v534 = vunpack.c.l.b16 %v497
    %v535 = vunpack.c.l.b16 %v498
    %v536 = vunpack.c.l.b16 %v499
    %v537 = vunpack.c.l.b16 %v500
    %v538 = vunpack.c.l.b16 %v501
    %v539 = vunpack.c.l.b16 %v502
    %v540 = vunpack.c.l.b16 %v503
    %v541 = vunpack.c.l.b16 %v504
    %v542 = vunpack.c.l.b16 %v505
    %v543 = vunpack.c.l.b16 %v506
    %v544 = vunpack.c.l.b16 %v507
    %v545 = vunpack.c.l.b16 %v508
    %v546 = vunpack.c.l.b16 %v509
    %v547 = vpack.c.b16 %v532, %v531
    %v548 = vpack.c.b16 %v534, %v533
    %v549 = vpack.c.b16 %v536, %v535
    %v550 = vpack.c.b16 %v538, %v537
    %v551 = vpack.c.b16 %v540, %v539
    %v552 = vpack.c.b16 %v542, %v541
    %v553 = vpack.c.b16 %v544, %v543
    %v554 = vpack.c.b16 %v546, %v545
    %563 = vmatprep.subr.bf16.mxu0 0
    %564 = vmatpush1.bf16.msra.mxu0 %v554
    %565 = vmatprep.subr.bf16.mxu0 0
    %566 = vmatpush1.bf16.msra.mxu0 %v553
    %567 = vmatprep.subr.bf16.mxu0 0
    %568 = vmatpush1.bf16.msra.mxu0 %v552
    %569 = vmatprep.subr.bf16.mxu0 0
    %570 = vmatpush1.bf16.msra.mxu0 %v551
    %571 = vmatprep.subr.bf16.mxu0 0
    %572 = vmatpush1.bf16.msra.mxu0 %v550
    %573 = vmatprep.subr.bf16.mxu0 0
    %574 = vmatpush1.bf16.msra.mxu0 %v549
    %575 = vmatprep.subr.bf16.mxu0 0
    %576 = vmatpush1.bf16.msra.mxu0 %v548
    %577 = vmatprep.subr.bf16.mxu0 0
    %578 = vmatpush1.bf16.msra.mxu0 %v547
    %579 = vmatprep.subr.bf16.mxu0 0
    %580 = vmatpush2.bf16.msra.mxu0 0
    %581 = vmatprep.subr.bf16.mxu0 0
    %582 = vmatpush2.bf16.msra.mxu0 0
    %583 = vmatprep.subr.bf16.mxu0 0
    %584 = vmatpush2.bf16.msra.mxu0 0
    %585 = vmatprep.subr.bf16.mxu0 0
    %586 = vmatpush2.bf16.msra.mxu0 0
    %587 = vmatprep.subr.bf16.mxu0 0
    %588 = vmatpush2.bf16.msra.mxu0 0
    %589 = vmatprep.subr.bf16.mxu0 0
    %590 = vmatpush2.bf16.msra.mxu0 0
    %591 = vmatprep.subr.bf16.mxu0 0
    %592 = vmatpush2.bf16.msra.mxu0 0
    %593 = vmatprep.subr.bf16.mxu0 0
    %594 = vmatpush2.bf16.msra.mxu0 0
    %595 = vmatprep.mubr.bf16.mxu0 0
    %596 = vmatmul.mubr.bf16.gmra.mxu0 %v493
    %v597 = vpop.f32.mrf.mxu0
    %v598 = vadd.f32 %v514, %v597
    %v599 = vpop.f32.mrf.mxu0
    %v600 = vpop.f32.mrf.mxu0
    %v601 = vpop.f32.mrf.mxu0
    %602 = vdwg.mxu0
    %vm603 = vcmask 31744
    %604 = vst.msk [vmem:[%s5] sm:$0xff] %vm603, %v598
    // Predicated region
    $region30: #{tpu_custom_call.1} parent=1 // pred_check
      _
    $region31: #{tpu_custom_call.1} parent=1 // pred_check_branch
      %606 = sbr.rel (0) target = $region33
    $region32: #{tpu_custom_call.1} parent=1 // pred_region
      _
    $region33: #{tpu_custom_call.1} parent=1 // pred_fallthru
      _
    // Predicated region
    $region34: #{tpu_custom_call.1} parent=1 // pred_check
      _
    $region35: #{tpu_custom_call.1} parent=1 // pred_check_branch
      %608 = sbr.rel (0) target = $region37
    $region36: #{tpu_custom_call.1} parent=1 // pred_region
      _
    $region37: #{tpu_custom_call.1} parent=1 // pred_fallthru
      _
    %609 = vsyncpa [#allocation3], 1
    %610 = vsyncpa [#allocation5], 1

</llo_original>
